<compile_context>
chip_gen: v5e
topology: v5e:2x2
jax: 0.10.0
libtpu: 0.0.40
codegen_flags: <defaults>
</compile_context>

<pallas_src>
import functools

import jax
import jax.numpy as jnp
from jax import lax
from jax.experimental import pallas as pl
from jax.experimental.pallas import tpu as pltpu

EPS = 1e-5  # PyTorch BatchNorm1d default eps


def _round_up(v, m):
    return (v + m - 1) // m * m


def _pick_channel_tile(c_pad):
    for t in (256, 128, 64, 32, 16, 8):
        if c_pad % t == 0:
            return t
    return c_pad


def conv_bn_relu_kernel(x_ref, w_ref, b_ref, o_ref, *, L, eps):
    """One fused Conv1d(k=3, p=1, bias) -> BatchNorm1d(train) -> ReLU stage.

    x_ref: (Cin, N*L)    lane-dense input (same block every grid step)
    w_ref: (3, TC, Cin)  conv taps for this output-channel tile
    b_ref: (TC, 1)       conv bias for this tile
    o_ref: (TC, N*L)     normalized + ReLU'd output tile
    """
    x = x_ref[...]
    nl = x.shape[-1]

    # One MXU matmul per tap over the whole lane-collapsed spatial axis.
    p0 = jnp.dot(w_ref[0], x, preferred_element_type=jnp.float32)
    p1 = jnp.dot(w_ref[1], x, preferred_element_type=jnp.float32)
    p2 = jnp.dot(w_ref[2], x, preferred_element_type=jnp.float32)

    # Neighbour taps: roll the matmul outputs along the lane axis (XLU) and
    # zero the columns that would read across a sequence (= batch) boundary.
    col = lax.broadcasted_iota(jnp.int32, p1.shape, 1) % L
    left = jnp.where(col == 0, 0.0, pltpu.roll(p0, shift=1, axis=1))
    right = jnp.where(col == L - 1, 0.0, pltpu.roll(p2, shift=nl - 1, axis=1))
    y = left + p1 + right + b_ref[...]

    # BatchNorm1d, training mode: biased batch stats per channel over (N, L).
    # Fresh init => gamma=1, beta=0 (folded out).
    # TODO(synk): running_mean/running_var buffer updates (module state) are not modeled.
    cnt = jnp.float32(nl)
    mean = jnp.sum(y, axis=1, keepdims=True) / cnt
    var = jnp.sum(y * y, axis=1, keepdims=True) / cnt - mean * mean
    inv = lax.rsqrt(jnp.maximum(var, 0.0) + eps)

    o_ref[...] = jnp.maximum((y - mean) * inv, 0.0)


def _conv_bn_relu_stage(x_cm, w_taps, b_col, *, L, tc):
    """x_cm: (Cin, N*L), w_taps: (3, Cout_p, Cin), b_col: (Cout_p, 1) -> (Cout_p, N*L)."""
    cin, nl = x_cm.shape
    cout_p = w_taps.shape[1]
    kernel = functools.partial(conv_bn_relu_kernel, L=L, eps=EPS)
    return pl.pallas_call(
        kernel,
        out_shape=jax.ShapeDtypeStruct((cout_p, nl), jnp.float32),
        grid_spec=pltpu.PrefetchScalarGridSpec(
            num_scalar_prefetch=0,
            grid=(cout_p // tc,),
            in_specs=[
                pl.BlockSpec((cin, nl), lambda t: (0, 0)),        # x: resident across steps
                pl.BlockSpec((3, tc, cin), lambda t: (0, t, 0)),  # weight tile
                pl.BlockSpec((tc, 1), lambda t: (t, 0)),          # bias tile
            ],
            out_specs=pl.BlockSpec((tc, nl), lambda t: (t, 0)),
        ),
        compiler_params=pltpu.CompilerParams(
            dimension_semantics=("parallel",),
            vmem_limit_bytes=32 * 1024 * 1024,
        ),
    )(x_cm, w_taps, b_col)


def conv_block_1d(x, w1, b1, w2, b2):
    """x: (N, Cin, L); w1: (Cout, Cin, 3); b1: (Cout,); w2: (Cout, Cout, 3); b2: (Cout,)."""
    N, Cin, L = x.shape
    Cout = w1.shape[0]
    Cout_p = _round_up(Cout, 8)
    tc = _pick_channel_tile(Cout_p)
    f32 = jnp.float32

    # Glue: lane-dense input layout (Cin, N*L); taps-first, channel-padded weights.
    x_cm = jnp.transpose(x.astype(f32), (1, 0, 2)).reshape(Cin, N * L)

    def prep(w, b, cin_p):
        cout, cin = w.shape[0], w.shape[1]
        wt = jnp.transpose(w.astype(f32), (2, 0, 1))              # (3, Cout, Cin)
        wt = jnp.pad(wt, ((0, 0), (0, Cout_p - cout), (0, cin_p - cin)))
        bc = jnp.pad(b.astype(f32), (0, Cout_p - cout)).reshape(Cout_p, 1)
        return wt, bc

    w1t, b1c = prep(w1, b1, Cin)
    w2t, b2c = prep(w2, b2, Cout_p)

    h = _conv_bn_relu_stage(x_cm, w1t, b1c, L=L, tc=tc)   # (Cout_p, N*L), stays lane-dense
    o = _conv_bn_relu_stage(h, w2t, b2c, L=L, tc=tc)      # (Cout_p, N*L)

    # Glue: back to PyTorch's (N, Cout, L).
    return jnp.transpose(o[:Cout].reshape(Cout, N, L), (1, 0, 2))


def conv_block_1d_ref(x, w1, b1, w2, b2):
    """Pure-JAX reference matching the PyTorch forward (training-mode BN)."""
    def stage(z, w, b):
        y = lax.conv_general_dilated(
            z, w, window_strides=(1,), padding=[(1, 1)],
            dimension_numbers=('NCH', 'OIH', 'NCH'))
        y = y + b[None, :, None]
        mean = jnp.mean(y, axis=(0, 2), keepdims=True)
        var = jnp.mean((y - mean) ** 2, axis=(0, 2), keepdims=True)
        return jnp.maximum((y - mean) / jnp.sqrt(var + EPS), 0.0)
    return stage(stage(x, w1, b1), w2, b2)


if __name__ == "__main__":
    N, C_IN, C_OUT, L = 2, 4, 8, 16

    key = jax.random.PRNGKey(0)
    kx, kw1, kb1, kw2, kb2 = jax.random.split(key, 5)

    x = jax.random.normal(kx, (N, C_IN, L), dtype=jnp.float32)

    def conv_init(kw, kb, cout, cin):
        # Deterministic Conv1d-style init: uniform(-1/sqrt(fan_in), 1/sqrt(fan_in)).
        bound = 1.0 / (cin * 3) ** 0.5
        w = jax.random.uniform(kw, (cout, cin, 3), jnp.float32, -bound, bound)
        b = jax.random.uniform(kb, (cout,), jnp.float32, -bound, bound)
        return w, b

    w1, b1 = conv_init(kw1, kb1, C_OUT, C_IN)
    w2, b2 = conv_init(kw2, kb2, C_OUT, C_OUT)

    out = jax.block_until_ready(conv_block_1d(x, w1, b1, w2, b2))
    ref = jax.block_until_ready(conv_block_1d_ref(x, w1, b1, w2, b2))

    assert out.shape == (N, C_OUT, L), out.shape
    err = float(jnp.max(jnp.abs(out - ref)))
    assert jnp.allclose(out, ref, atol=1e-4, rtol=1e-4), err

    print("KERNEL_OK")
</pallas_src>

<mosaic_0001>
module attributes {stable_mosaic.version = 11 : i64} {
  func.func @conv_bn_relu_kernel(%arg0: i32, %arg1: memref<4x32xf32, #tpu.memory_space<vmem>>, %arg2: memref<3x8x4xf32, #tpu.memory_space<vmem>>, %arg3: memref<8x1xf32, #tpu.memory_space<vmem>>, %arg4: memref<8x32xf32, #tpu.memory_space<vmem>>) attributes {dimension_semantics = [#tpu.dimension_semantics<parallel>], iteration_bounds = array<i64: 1>, scalar_prefetch = 0 : i64, scratch_operands = 0 : i64, tpu.core_type = #tpu.core_type<tc>, window_params = [{pipeline_mode = #tpu.pipeline_mode<synchronous>, transform_indices = @transform_0, window_bounds = array<i64: 4, 32>}, {transform_indices = @transform_1, window_bounds = array<i64: 3, 8, 4>}, {transform_indices = @transform_2, window_bounds = array<i64: 8, 1>}, {transform_indices = @transform_3, window_bounds = array<i64: 8, 32>}]} {
    %c0 = arith.constant 0 : index
    %c0_0 = arith.constant 0 : index
    %0 = vector.load %arg1[%c0, %c0_0] : memref<4x32xf32, #tpu.memory_space<vmem>>, vector<4x32xf32>
    %c0_1 = arith.constant 0 : index
    %c0_2 = arith.constant 0 : index
    %c0_3 = arith.constant 0 : index
    %1 = vector.load %arg2[%c0_1, %c0_2, %c0_3] : memref<3x8x4xf32, #tpu.memory_space<vmem>>, vector<1x8x4xf32>
    %2 = vector.shape_cast %1 : vector<1x8x4xf32> to vector<8x4xf32>
    %cst = arith.constant dense<0.000000e+00> : vector<8x32xf32>
    %3 = tpu.matmul %2, %0, %cst {dimension_numbers = #tpu.dot_dimension_numbers<[1], [0], [0], [1], [0, 0, 1, 1], [], []>} : vector<8x4xf32>, vector<4x32xf32>, vector<8x32xf32> -> vector<8x32xf32>
    %c1 = arith.constant 1 : index
    %c0_4 = arith.constant 0 : index
    %c0_5 = arith.constant 0 : index
    %4 = vector.load %arg2[%c1, %c0_4, %c0_5] : memref<3x8x4xf32, #tpu.memory_space<vmem>>, vector<1x8x4xf32>
    %5 = vector.shape_cast %4 : vector<1x8x4xf32> to vector<8x4xf32>
    %cst_6 = arith.constant dense<0.000000e+00> : vector<8x32xf32>
    %6 = tpu.matmul %5, %0, %cst_6 {dimension_numbers = #tpu.dot_dimension_numbers<[1], [0], [0], [1], [0, 0, 1, 1], [], []>} : vector<8x4xf32>, vector<4x32xf32>, vector<8x32xf32> -> vector<8x32xf32>
    %c2 = arith.constant 2 : index
    %c0_7 = arith.constant 0 : index
    %c0_8 = arith.constant 0 : index
    %7 = vector.load %arg2[%c2, %c0_7, %c0_8] : memref<3x8x4xf32, #tpu.memory_space<vmem>>, vector<1x8x4xf32>
    %8 = vector.shape_cast %7 : vector<1x8x4xf32> to vector<8x4xf32>
    %cst_9 = arith.constant dense<0.000000e+00> : vector<8x32xf32>
    %9 = tpu.matmul %8, %0, %cst_9 {dimension_numbers = #tpu.dot_dimension_numbers<[1], [0], [0], [1], [0, 0, 1, 1], [], []>} : vector<8x4xf32>, vector<4x32xf32>, vector<8x32xf32> -> vector<8x32xf32>
    %10 = tpu.iota {dimensions = array<i32: 1>} : vector<8x32xi32>
    %c16_i32 = arith.constant 16 : i32
    %c0_i32 = arith.constant 0 : i32
    %11 = arith.cmpi eq, %c16_i32, %c0_i32 : i32
    %c1_i32 = arith.constant 1 : i32
    %12 = arith.select %11, %c1_i32, %c16_i32 : i32
    %13 = vector.broadcast %12 : i32 to vector<8x32xi32>
    %14 = arith.remsi %10, %13 : vector<8x32xi32>
    %c0_i32_10 = arith.constant 0 : i32
    %15 = vector.broadcast %c0_i32_10 : i32 to vector<8x32xi32>
    %16 = arith.cmpi ne, %14, %15 : vector<8x32xi32>
    %c0_i32_11 = arith.constant 0 : i32
    %17 = vector.broadcast %c0_i32_11 : i32 to vector<8x32xi32>
    %18 = arith.cmpi slt, %14, %17 : vector<8x32xi32>
    %c0_i32_12 = arith.constant 0 : i32
    %19 = arith.cmpi slt, %12, %c0_i32_12 : i32
    %20 = vector.broadcast %19 : i1 to vector<8x32xi1>
    %21 = vector.broadcast %20 : vector<8x32xi1> to vector<8x32xi1>
    %22 = arith.xori %18, %21 : vector<8x32xi1>
    %23 = arith.andi %22, %16 : vector<8x32xi1>
    %24 = vector.broadcast %12 : i32 to vector<8x32xi32>
    %25 = arith.addi %14, %24 : vector<8x32xi32>
    %26 = arith.select %23, %25, %14 : vector<8x32xi1>, vector<8x32xi32>
    %c0_i32_13 = arith.constant 0 : i32
    %27 = vector.broadcast %c0_i32_13 : i32 to vector<8x32xi32>
    %28 = arith.cmpi eq, %26, %27 : vector<8x32xi32>
    %c1_i32_14 = arith.constant 1 : i32
    %29 = tpu.dynamic_rotate %3 by %c1_i32_14 dim 1 : vector<8x32xf32>, i32 -> vector<8x32xf32>
    %cst_15 = arith.constant 0.000000e+00 : f32
    %30 = vector.broadcast %cst_15 : f32 to vector<8x32xf32>
    %31 = arith.select %28, %30, %29 : vector<8x32xi1>, vector<8x32xf32>
    %c15_i32 = arith.constant 15 : i32
    %32 = vector.broadcast %c15_i32 : i32 to vector<8x32xi32>
    %33 = arith.cmpi eq, %26, %32 : vector<8x32xi32>
    %c31_i32 = arith.constant 31 : i32
    %34 = tpu.dynamic_rotate %9 by %c31_i32 dim 1 : vector<8x32xf32>, i32 -> vector<8x32xf32>
    %cst_16 = arith.constant 0.000000e+00 : f32
    %35 = vector.broadcast %cst_16 : f32 to vector<8x32xf32>
    %36 = arith.select %33, %35, %34 : vector<8x32xi1>, vector<8x32xf32>
    %37 = arith.addf %31, %6 : vector<8x32xf32>
    %38 = arith.addf %37, %36 : vector<8x32xf32>
    %c0_17 = arith.constant 0 : index
    %c0_18 = arith.constant 0 : index
    %39 = vector.load %arg3[%c0_17, %c0_18] : memref<8x1xf32, #tpu.memory_space<vmem>>, vector<8x1xf32>
    %40 = vector.broadcast %39 : vector<8x1xf32> to vector<8x32xf32>
    %41 = arith.addf %38, %40 : vector<8x32xf32>
    %cst_19 = arith.constant dense<0.000000e+00> : vector<8xf32>
    %42 = vector.multi_reduction <add>, %41, %cst_19 [1] : vector<8x32xf32> to vector<8xf32>
    %43 = vector.shape_cast %42 : vector<8xf32> to vector<8x1xf32>
    %cst_20 = arith.constant 3.200000e+01 : f32
    %44 = vector.broadcast %cst_20 : f32 to vector<8x1xf32>
    %45 = arith.divf %43, %44 : vector<8x1xf32>
    %46 = arith.mulf %41, %41 : vector<8x32xf32>
    %cst_21 = arith.constant dense<0.000000e+00> : vector<8xf32>
    %47 = vector.multi_reduction <add>, %46, %cst_21 [1] : vector<8x32xf32> to vector<8xf32>
    %48 = vector.shape_cast %47 : vector<8xf32> to vector<8x1xf32>
    %cst_22 = arith.constant 3.200000e+01 : f32
    %49 = vector.broadcast %cst_22 : f32 to vector<8x1xf32>
    %50 = arith.divf %48, %49 : vector<8x1xf32>
    %51 = arith.mulf %45, %45 : vector<8x1xf32>
    %52 = arith.subf %50, %51 : vector<8x1xf32>
    %cst_23 = arith.constant 0.000000e+00 : f32
    %53 = vector.broadcast %cst_23 : f32 to vector<8x1xf32>
    %54 = arith.maximumf %52, %53 : vector<8x1xf32>
    %cst_24 = arith.constant 9.99999974E-6 : f32
    %55 = vector.broadcast %cst_24 : f32 to vector<8x1xf32>
    %56 = arith.addf %54, %55 : vector<8x1xf32>
    %57 = math.rsqrt %56 : vector<8x1xf32>
    %58 = vector.broadcast %45 : vector<8x1xf32> to vector<8x32xf32>
    %59 = arith.subf %41, %58 : vector<8x32xf32>
    %60 = vector.broadcast %57 : vector<8x1xf32> to vector<8x32xf32>
    %61 = arith.mulf %59, %60 : vector<8x32xf32>
    %cst_25 = arith.constant 0.000000e+00 : f32
    %62 = vector.broadcast %cst_25 : f32 to vector<8x32xf32>
    %63 = arith.maximumf %61, %62 : vector<8x32xf32>
    %c0_26 = arith.constant 0 : index
    %c0_27 = arith.constant 0 : index
    %64 = vector.load %arg4[%c0_26, %c0_27] : memref<8x32xf32, #tpu.memory_space<vmem>>, vector<8x32xf32>
    tpu.vector_store %arg4[%c0_26, %c0_27], %63 {strides = array<i32>} : memref<8x32xf32, #tpu.memory_space<vmem>>, vector<8x32xf32>,
    return
  }
  func.func @transform_0(%arg0: i32) -> (i32, i32) {
    %c0_i32 = arith.constant 0 : i32
    %c0_i32_0 = arith.constant 0 : i32
    %c0_i32_1 = arith.constant 0 : i32
    return %c0_i32, %c0_i32_0 : i32, i32
  }
  func.func @transform_1(%arg0: i32) -> (i32, i32, i32) {
    %c0_i32 = arith.constant 0 : i32
    %c0_i32_0 = arith.constant 0 : i32
    %c0_i32_1 = arith.constant 0 : i32
    return %c0_i32, %arg0, %c0_i32_0 : i32, i32, i32
  }
  func.func @transform_2(%arg0: i32) -> (i32, i32) {
    %c0_i32 = arith.constant 0 : i32
    %c0_i32_0 = arith.constant 0 : i32
    return %arg0, %c0_i32 : i32, i32
  }
  func.func @transform_3(%arg0: i32) -> (i32, i32) {
    %c0_i32 = arith.constant 0 : i32
    %c0_i32_0 = arith.constant 0 : i32
    return %arg0, %c0_i32 : i32, i32
  }
}

</mosaic_0001>

<llo_original>
// kernel: tpu_custom_call.1
$region0: #{tpu_custom_call.1}
  #allocation0 [shape = 'u32[]', space=smem, size = 0x4, offset = 0x4, fixed_abs, tag = 'smem constant byte address 0x4 - core index']
  #allocation1 [shape = 'u32[72,128]{1,0:T(1,128)}', space=vmem, size = 0x9000, scoped, tag = 'internal scratch']
  %s0 = inlined_call_operand.vmem [shape: f32[4,32], index: 0, kind: input, shape index: {}]
  %s1 = inlined_call_operand.vmem [shape: f32[3,8,4], index: 1, kind: input, shape index: {}]
  %s2 = inlined_call_operand.vmem [shape: f32[8,1], index: 2, kind: input, shape index: {}]
  %s3 = inlined_call_operand.hbm [shape: f32[8,32], index: 3, kind: output, shape index: {}]
  %s4 = sld [smem:[#allocation0]]
  $region22: #{tpu_custom_call.1} parent=0
    _
  %s6 = ssub.s32 1, %s4
  %s7 = scalar_select 0, %s6, %s4
  $region1: #{tpu_custom_call.1} parent=0
    #allocation2 [shape = 'u8[4096]{0}', space=vmem, size = 0x1000, scoped, tag = 'output window, operand 0, single buffered']
    #allocation3 [shape = 's32[1]{0}', space=sflag, size = 0x4, scoped, tag = 'scoped memory for tpu_custom_call.1']
    %8 = vsyncpa [#allocation3], 0
    // Predicated region
    $region2: #{tpu_custom_call.1} parent=1 // pred_check
      _
    $region3: #{tpu_custom_call.1} parent=1 // pred_check_branch
      %10 = sbr.rel (0) target = $region5
    $region4: #{tpu_custom_call.1} parent=1 // pred_region
      _
    $region5: #{tpu_custom_call.1} parent=1 // pred_fallthru
      _
    // Predicated region
    $region6: #{tpu_custom_call.1} parent=1 // pred_check
      _
    $region7: #{tpu_custom_call.1} parent=1 // pred_check_branch
      %12 = sbr.rel (0) target = $region9
    $region8: #{tpu_custom_call.1} parent=1 // pred_region
      _
    $region9: #{tpu_custom_call.1} parent=1 // pred_fallthru
      _
    // Predicated region
    $region10: #{tpu_custom_call.1} parent=1 // pred_check
      _
    $region11: #{tpu_custom_call.1} parent=1 // pred_check_branch
      %14 = sbr.rel (0) target = $region13
    $region12: #{tpu_custom_call.1} parent=1 // pred_region
      _
    $region13: #{tpu_custom_call.1} parent=1 // pred_fallthru
      _
    %v15 = vld [vmem:[%s0] sm:$0xf]
    %v16 = vld [vmem:[%s1] sm:$0xff]
    %vm17 = vcmask 31744
    %v19 = vsel %vm17, %v16, 0
    %vm21 = vcmask 1043456
    %v23 = vsel %vm21, %v15, 0
    %25 = vmatpush.msra.mxu0 0.0
    %26 = vmatpush.msra.mxu0 0.0
    %27 = vmatpush.msra.mxu0 0.0
    %28 = vmatpush.msra.mxu0 0.0
    %29 = vmatpush.msra.mxu0 0.0
    %30 = vmatpush.msra.mxu0 0.0
    %31 = vmatpush.msra.mxu0 0.0
    %32 = vmatpush.msra.mxu0 0.0
    %33 = vmatpush.msra.mxu0 0.0
    %34 = vmatpush.msra.mxu0 0.0
    %35 = vmatpush.msra.mxu0 0.0
    %36 = vmatpush.msra.mxu0 0.0
    %37 = vmatpush.msra.mxu0 0.0
    %38 = vmatpush.msra.mxu0 0.0
    %39 = vmatpush.msra.mxu0 0.0
    %40 = vmatpush.msra.mxu0 %v23
    %41 = vmatmul.f32.gmra.mxu0 %v19
    %v42 = vpop.f32.mrf.mxu0
    %v43 = vadd.f32 0.0, %v42
    %44 = vdwg.mxu0
    %s45 = scalar_lea.vmem %s1, 8
    %v46 = vld [vmem:[%s45] sm:$0xff]
    %v48 = vsel %vm17, %v46, 0
    %50 = vmatpush.msra.mxu0 0.0
    %51 = vmatpush.msra.mxu0 0.0
    %52 = vmatpush.msra.mxu0 0.0
    %53 = vmatpush.msra.mxu0 0.0
    %54 = vmatpush.msra.mxu0 0.0
    %55 = vmatpush.msra.mxu0 0.0
    %56 = vmatpush.msra.mxu0 0.0
    %57 = vmatpush.msra.mxu0 0.0
    %58 = vmatpush.msra.mxu0 0.0
    %59 = vmatpush.msra.mxu0 0.0
    %60 = vmatpush.msra.mxu0 0.0
    %61 = vmatpush.msra.mxu0 0.0
    %62 = vmatpush.msra.mxu0 0.0
    %63 = vmatpush.msra.mxu0 0.0
    %64 = vmatpush.msra.mxu0 0.0
    %65 = vmatpush.msra.mxu0 %v23
    %66 = vmatmul.f32.gmra.mxu0 %v48
    %v67 = vpop.f32.mrf.mxu0
    %v68 = vadd.f32 0.0, %v67
    %69 = vdwg.mxu0
    %s70 = scalar_lea.vmem %s1, 16
    %v71 = vld [vmem:[%s70] sm:$0xff]
    %v73 = vsel %vm17, %v71, 0
    %75 = vmatpush.msra.mxu0 0.0
    %76 = vmatpush.msra.mxu0 0.0
    %77 = vmatpush.msra.mxu0 0.0
    %78 = vmatpush.msra.mxu0 0.0
    %79 = vmatpush.msra.mxu0 0.0
    %80 = vmatpush.msra.mxu0 0.0
    %81 = vmatpush.msra.mxu0 0.0
    %82 = vmatpush.msra.mxu0 0.0
    %83 = vmatpush.msra.mxu0 0.0
    %84 = vmatpush.msra.mxu0 0.0
    %85 = vmatpush.msra.mxu0 0.0
    %86 = vmatpush.msra.mxu0 0.0
    %87 = vmatpush.msra.mxu0 0.0
    %88 = vmatpush.msra.mxu0 0.0
    %89 = vmatpush.msra.mxu0 0.0
    %90 = vmatpush.msra.mxu0 %v23
    %91 = vmatmul.f32.gmra.mxu0 %v73
    %v92 = vpop.f32.mrf.mxu0
    %v93 = vadd.f32 0.0, %v92
    %94 = vdwg.mxu0
    %v95 = vlaneseq
    %v96 = vand.u32 %v95, 127
    %vm97 = vcmp.lt.s32.totalorder %v96, 0
    %v98 = vsub.s32 0, %v96
    %v99 = vsel %vm97, %v98, %v96
    %v100 = vshrl.u32 %v99, 4
    %v101 = vand.u32 %v99, 15
    %v102 = vsub.s32 0, %v101
    %v103 = vsel %vm97, %v102, %v101
    %vm104 = vcmp.ne.s32.totalorder %v103, 0
    %vm105 = vcmp.lt.s32.totalorder %v103, 0
    %vm106 = vmand %vm105, %vm104
    %v107 = vadd.s32 %v103, 16
    %v108 = vsel %vm106, %v107, %v103
    %vm109 = vcmp.eq.s32.totalorder %v108, 0
    %vm110 = vcmask 1047808
    %111 = vrot.lane.b32.xlu0 %v43, 32
    %v112 = vpop.permute.xlu0 %111
    %v113 = vsel %vm110, %v112, %v43
    %114 = vrot.lane.b32.xlu0 %v113, 32
    %v115 = vpop.permute.xlu0 %114
    %v116 = vsel %vm110, %v115, %v43
    %118 = vrot.lane.b32.xlu0 %v116, 97
    %v119 = vpop.permute.xlu0 %118
    %v121 = vsel %vm109, 0.0, %v119
    %vm122 = vcmp.eq.s32.totalorder %v108, 15
    %123 = vrot.lane.b32.xlu0 %v93, 32
    %v124 = vpop.permute.xlu0 %123
    %v125 = vsel %vm110, %v124, %v93
    %126 = vrot.lane.b32.xlu0 %v125, 32
    %v127 = vpop.permute.xlu0 %126
    %v128 = vsel %vm110, %v127, %v93
    %130 = vrot.lane.b32.xlu0 %v128, 127
    %v131 = vpop.permute.xlu0 %130
    %v133 = vsel %vm122, 0.0, %v131
    %v134 = vadd.f32 %v121, %v68
    %v135 = vadd.f32 %v134, %v133
    %v136 = vld [vmem:[%s2] sm:$0xff]
    %138 = vset.pattern.permute.xlu0 0
    %139 = vperm.xlu0 %138, %v136
    %v140 = vpop.permute.xlu0 %139
    %v142 = vadd.f32 %v135, %v140
    %vm143 = vcmask 261120
    %v144 = vsel %vm143, %v142, 0.0
    %145 = vadd.xlane.f32.xlu0 %v144
    %v146 = vpop.xlane.xlu0 %145
    %v147 = vrcp.pop 32.0
    %v148 = vmul.f32 32.0, %v147
    %v149 = vsub.f32 1.0, %v148
    %v150 = vmul.f32 %v147, %v149
    %v151 = vadd.f32 %v147, %v150
    %vm152 = vweird.f32 %v147
    %v153 = vsel %vm152, %v147, %v151
    %v154 = vmul.f32 %v146, %v153
    %v155 = vmul.f32 %v142, %v142
    %v156 = vsel %vm143, %v155, 0.0
    %157 = vadd.xlane.f32.xlu0 %v156
    %v158 = vpop.xlane.xlu0 %157
    %v159 = vmul.f32 %v158, %v153
    %v160 = vmul.f32 %v154, %v154
    %v161 = vsub.f32 %v159, %v160
    %v162 = vmax.f32 %v161, 0.0
    %v163 = vadd.f32 %v162, 1e-05
    %v164 = vrsqrt.pop %v163
    %v165 = vmul.f32 %v164, %v163
    %v166 = vmul.f32 %v165, %v164
    %v167 = vmul.f32 0.5, %v166
    %v168 = vsub.f32 1.5, %v167
    %v169 = vmul.f32 %v164, %v168
    %vm170 = vweird.f32 %v163
    %vm171 = vweird.f32 %v164
    %vm172 = vmor %vm170, %vm171
    %v173 = vsel %vm172, %v164, %v169
    %v174 = vsub.f32 %v142, %v154
    %v175 = vmul.f32 %v174, %v173
    %v176 = vmax.f32 %v175, 0.0
    %177 = vst.msk [vmem:[#allocation2] sm:$0xff] %vm143, %v176
    // Predicated region
    $region14: #{tpu_custom_call.1} parent=1 // pred_check
      _
    $region15: #{tpu_custom_call.1} parent=1 // pred_check_branch
      %179 = sbr.rel (0) target = $region17
    $region16: #{tpu_custom_call.1} parent=1 // pred_region
      %181 = vsyncadd [#allocation3], 0
      %s183 = sshll.u32 [#allocation2], 4
      %s184 = int_to_ptr.vmem [resolvable:$true] %s183
      %s185 = sshll.u32 %s3, 4
      %s186 = int_to_ptr.hbm [resolvable:$true] %s185
      %188 = dma.vmem_to_hbm [thread:$0]  %s184, 128, %s186, [#allocation3]
    $region17: #{tpu_custom_call.1} parent=1 // pred_fallthru
      _
    // Predicated region
    $region18: #{tpu_custom_call.1} parent=1 // pred_check
      _
    $region19: #{tpu_custom_call.1} parent=1 // pred_check_branch
      %190 = sbr.rel (0) target = $region21
    $region20: #{tpu_custom_call.1} parent=1 // pred_region
      %192 = dma.done [#allocation3], 128
    $region21: #{tpu_custom_call.1} parent=1 // pred_fallthru
      _
    %193 = vsyncpa [#allocation3], 1

</llo_original>
